<compile_context>
chip_gen: v6e
topology: v6e:2x2x1
jax: 0.10.0
libtpu: 0.0.40
codegen_flags: <defaults>
</compile_context>

<pallas_src>
import jax
import jax.numpy as jnp
from jax.experimental import pallas as pl
from jax.experimental.pallas import tpu as pltpu  # noqa: F401  (TPU backend)


def _round_up(x, m):
    return (x + m - 1) // m * m


def _full_spec(shape):
    # Whole-array block, single grid point.
    return pl.BlockSpec(shape, lambda: tuple(0 for _ in shape))


# ----------------------------- Pallas kernel -------------------------------
def _decoder_step_kernel(
    x_ref, h_ref,                 # (Bp, Hp) embedded input / previous hidden
    wx_ref, wh_ref,               # (Hp, 3*Hp) stacked [r|z|n] gate weights
    bx_ref, bh_ref,               # (1, 3*Hp)  stacked gate biases
    wout_ref, bout_ref,           # (Hp, Vp) output proj, (1, Vp) bias (-1e30 in pad)
    logp_ref, hnew_ref,           # outputs: (Bp, Vp) log-probs, (Bp, Hp) new hidden
):
    Hp = h_ref.shape[1]
    x = x_ref[...]
    h = h_ref[...]

    # Two fused gate matmuls (each gate block padded to Hp lanes -> the
    # slices below land on vreg-aligned lane offsets 0, Hp, 2*Hp).
    gx = jnp.dot(x, wx_ref[...], preferred_element_type=jnp.float32) + bx_ref[...]
    gh = jnp.dot(h, wh_ref[...], preferred_element_type=jnp.float32) + bh_ref[...]

    gx_r, gx_z, gx_n = gx[:, 0:Hp], gx[:, Hp:2 * Hp], gx[:, 2 * Hp:3 * Hp]
    gh_r, gh_z, gh_n = gh[:, 0:Hp], gh[:, Hp:2 * Hp], gh[:, 2 * Hp:3 * Hp]

    # PyTorch GRU convention (r, z, n); b_ir+b_hr and b_iz+b_hz pre-folded
    # into bx, b_hn kept in bh so it sits inside the r * (...) term.
    r = jax.nn.sigmoid(gx_r + gh_r)
    z = jax.nn.sigmoid(gx_z + gh_z)
    n = jnp.tanh(gx_n + r * gh_n)
    h_new = (1.0 - z) * n + z * h

    # Output projection + log_softmax over the lane-padded vocab axis.
    # Padded vocab columns have zero weights and a -1e30 bias -> exp() == 0,
    # so the normalization constant only sees the real vocabulary.
    logits = jnp.dot(h_new, wout_ref[...], preferred_element_type=jnp.float32) + bout_ref[...]
    m = jnp.max(logits, axis=-1, keepdims=True)
    e = jnp.exp(logits - m)                          # single EUP pass, reused
    lse = m + jnp.log(jnp.sum(e, axis=-1, keepdims=True))

    logp_ref[...] = logits - lse
    hnew_ref[...] = h_new


@jax.jit
def decoder_step_pallas(x_p, h_p, wx, wh, bx, bh, wout, bout):
    """One GRU decoder step + log_softmax inside a single Pallas kernel.

    All operands are already sublane/lane padded:
      x_p, h_p : (Bp, Hp)   Bp % 8 == 0, Hp % 128 == 0
      wx, wh   : (Hp, 3*Hp) stacked gate weights
      bx, bh   : (1, 3*Hp)  stacked gate biases
      wout     : (Hp, Vp)   Vp % 128 == 0
      bout     : (1, Vp)    -1e30 in padded columns
    Returns (logp (Bp, Vp), h_new (Bp, Hp)).
    """
    Bp, Hp = x_p.shape
    Vp = wout.shape[1]

    in_arrays = (x_p, h_p, wx, wh, bx, bh, wout, bout)
    in_specs = [_full_spec(a.shape) for a in in_arrays]
    out_shape = (
        jax.ShapeDtypeStruct((Bp, Vp), jnp.float32),
        jax.ShapeDtypeStruct((Bp, Hp), jnp.float32),
    )
    out_specs = (_full_spec((Bp, Vp)), _full_spec((Bp, Hp)))

    flops = (2 * Bp * Hp * 3 * Hp) * 2 + 2 * Bp * Hp * Vp + 12 * Bp * Hp + 6 * Bp * Vp
    transcendentals = Bp * (3 * Hp + Vp + 1)
    bytes_accessed = 4 * sum(a.size for a in in_arrays) + 4 * (Bp * Vp + Bp * Hp)
    cost = pl.CostEstimate(flops=flops, transcendentals=transcendentals,
                           bytes_accessed=bytes_accessed)

    logp, h_new = pl.pallas_call(
        _decoder_step_kernel,
        out_shape=out_shape,
        grid=(),
        in_specs=in_specs,
        out_specs=out_specs,
        cost_estimate=cost,
    )(*in_arrays)
    return logp, h_new


# ------------------------------ Decoder glue --------------------------------
class DecoderPallas:
    """JAX/Pallas port of the PyTorch `Decoder` module."""

    def __init__(self, hidden_size, output_size, max_length,
                 teacher_forcing_ratio, sos_id, key):
        self.hidden_size = hidden_size
        self.output_size = output_size
        self.max_length = max_length
        self.teacher_forcing_ratio = teacher_forcing_ratio
        self.sos_id = sos_id

        H, V = hidden_size, output_size
        Hp = _round_up(H, 128)      # lane-align the hidden axis
        Vp = _round_up(V, 128)      # lane-align the vocab axis
        self.Hp, self.Vp = Hp, Vp

        ks = jax.random.split(key, 8)
        bound = 1.0 / (float(H) ** 0.5)

        # nn.Embedding(output_size, hidden_size): N(0, 1); lane-padded table
        # so the (glue) gather already yields (B, Hp) rows.
        emb = jax.random.normal(ks[0], (V, H), jnp.float32)
        self.embedding_p = jnp.zeros((V, Hp), jnp.float32).at[:, :H].set(emb)

        # nn.GRU(H, H): weight_ih_l0 (3H, H), weight_hh_l0 (3H, H), biases (3H,)
        w_ih = jax.random.uniform(ks[1], (3 * H, H), jnp.float32, -bound, bound)
        w_hh = jax.random.uniform(ks[2], (3 * H, H), jnp.float32, -bound, bound)
        b_ih = jax.random.uniform(ks[3], (3 * H,), jnp.float32, -bound, bound)
        b_hh = jax.random.uniform(ks[4], (3 * H,), jnp.float32, -bound, bound)

        # nn.Linear(H, V): weight (V, H), bias (V,)
        w_out = jax.random.uniform(ks[5], (V, H), jnp.float32, -bound, bound)
        b_out = jax.random.uniform(ks[6], (V,), jnp.float32, -bound, bound)

        # Pack the gate weights into two (Hp, 3*Hp) stacks: block g occupies
        # lanes [g*Hp, g*Hp+H); everything else is zero padding.
        wx = jnp.zeros((Hp, 3 * Hp), jnp.float32)
        wh = jnp.zeros((Hp, 3 * Hp), jnp.float32)
        for g in range(3):
            wx = wx.at[:H, g * Hp:g * Hp + H].set(w_ih[g * H:(g + 1) * H].T)
            wh = wh.at[:H, g * Hp:g * Hp + H].set(w_hh[g * H:(g + 1) * H].T)

        # Bias folding: r and z gates apply sigmoid to (x-path + h-path), so
        # both biases collapse into bx; the n gate needs b_hn inside the
        # r * (...) term, so it stays in bh.
        bx = jnp.zeros((1, 3 * Hp), jnp.float32)
        bh = jnp.zeros((1, 3 * Hp), jnp.float32)
        bx = bx.at[0, 0 * Hp:0 * Hp + H].set(b_ih[0:H] + b_hh[0:H])
        bx = bx.at[0, 1 * Hp:1 * Hp + H].set(b_ih[H:2 * H] + b_hh[H:2 * H])
        bx = bx.at[0, 2 * Hp:2 * Hp + H].set(b_ih[2 * H:3 * H])
        bh = bh.at[0, 2 * Hp:2 * Hp + H].set(b_hh[2 * H:3 * H])

        # Output projection, lane-padded; padded vocab columns get -1e30 bias
        # so they drop out of the log_softmax normalization.
        wout = jnp.zeros((Hp, Vp), jnp.float32).at[:H, :V].set(w_out.T)
        bout = jnp.full((1, Vp), -1e30, jnp.float32).at[0, :V].set(b_out)

        self.params = (wx, wh, bx, bh, wout, bout)

    def forward_step(self, inputs, hidden):
        # inputs: (1, B) int32 token ids ; hidden: (1, B, H)
        B = inputs.shape[1]
        Bp = _round_up(B, 8)                               # sublane-align batch
        embedded = self.embedding_p[inputs[0]]             # (B, Hp) gather (glue)
        x_p = jnp.zeros((Bp, self.Hp), jnp.float32).at[:B].set(embedded)
        h_p = jnp.zeros((Bp, self.Hp), jnp.float32).at[:B, :self.hidden_size].set(hidden[0])

        logp_p, h_new_p = decoder_step_pallas(x_p, h_p, *self.params)

        logp = logp_p[:B, :self.output_size]               # (B, V)
        h_new = h_new_p[:B, :self.hidden_size]             # (B, H)
        return logp, h_new[None, :, :]                     # (B, V), (1, B, H)

    def forward(self, context_vector, targets):
        target_vars, target_lengths = targets
        batch_size = context_vector.shape[1]

        decoder_input = jnp.full((1, batch_size), self.sos_id, jnp.int32)
        decoder_hidden = context_vector
        max_target_length = int(max(target_lengths))
        decoder_outputs = jnp.zeros(
            (max_target_length, batch_size, self.output_size), jnp.float32)

        # NOTE: the reference returns inside the time loop, so exactly one
        # decode step is executed regardless of max_target_length / teacher
        # forcing; we reproduce that behaviour.
        # TODO(synk): if the reference bug were fixed (T > 1 real steps), move
        # the time loop inside one pallas_call with weights resident in VMEM.
        t = 0
        step_out, decoder_hidden = self.forward_step(decoder_input, decoder_hidden)
        decoder_outputs = decoder_outputs.at[t].set(step_out)
        return decoder_outputs, decoder_hidden


# --------------------------------- main --------------------------------------
if __name__ == "__main__":
    B = 2            # batch
    H = 32           # hidden_size
    V = 48           # output_size (vocab)
    T = 5            # max target length
    SOS = 1

    key = jax.random.PRNGKey(0)
    k_dec, k_ctx, k_tgt = jax.random.split(key, 3)

    decoder = DecoderPallas(hidden_size=H, output_size=V, max_length=10,
                            teacher_forcing_ratio=0.5, sos_id=SOS, key=k_dec)

    # context_vector plays the role of the encoder's final hidden: (1, B, H)
    context_vector = jax.random.normal(k_ctx, (1, B, H), jnp.float32)
    target_vars = jax.random.randint(k_tgt, (T, B), 0, V, jnp.int32)
    target_lengths = [T, T - 1]

    decoder_outputs, decoder_hidden = decoder.forward(
        context_vector, (target_vars, target_lengths))
    jax.block_until_ready(decoder_outputs)
    jax.block_until_ready(decoder_hidden)

    # light sanity checks
    assert decoder_outputs.shape == (T, B, V)
    assert decoder_hidden.shape == (1, B, H)
    # row 0 should be valid log-probs (sum of exp == 1), rows >0 are zeros
    probs_sum = jnp.sum(jnp.exp(decoder_outputs[0]), axis=-1)
    assert bool(jnp.allclose(probs_sum, 1.0, atol=1e-4))
    assert bool(jnp.all(decoder_outputs[1:] == 0.0))
    assert bool(jnp.all(jnp.isfinite(decoder_hidden)))

    print("KERNEL_OK")
</pallas_src>

<mosaic_0001>
module attributes {stable_mosaic.version = 11 : i64} {
  func.func @_decoder_step_kernel(%arg0: memref<8x128xf32, #tpu.memory_space<vmem>>, %arg1: memref<8x128xf32, #tpu.memory_space<vmem>>, %arg2: memref<128x384xf32, #tpu.memory_space<vmem>>, %arg3: memref<128x384xf32, #tpu.memory_space<vmem>>, %arg4: memref<1x384xf32, #tpu.memory_space<vmem>>, %arg5: memref<1x384xf32, #tpu.memory_space<vmem>>, %arg6: memref<128x128xf32, #tpu.memory_space<vmem>>, %arg7: memref<1x128xf32, #tpu.memory_space<vmem>>, %arg8: memref<8x128xf32, #tpu.memory_space<vmem>>, %arg9: memref<8x128xf32, #tpu.memory_space<vmem>>) attributes {dimension_semantics = [], scalar_prefetch = 0 : i64, scratch_operands = 0 : i64, tpu.core_type = #tpu.core_type<tc>} {
    %c0 = arith.constant 0 : index
    %c0_0 = arith.constant 0 : index
    %0 = vector.load %arg0[%c0, %c0_0] : memref<8x128xf32, #tpu.memory_space<vmem>>, vector<8x128xf32>
    %c0_1 = arith.constant 0 : index
    %c0_2 = arith.constant 0 : index
    %1 = vector.load %arg1[%c0_1, %c0_2] : memref<8x128xf32, #tpu.memory_space<vmem>>, vector<8x128xf32>
    %c0_3 = arith.constant 0 : index
    %c0_4 = arith.constant 0 : index
    %2 = vector.load %arg2[%c0_3, %c0_4] : memref<128x384xf32, #tpu.memory_space<vmem>>, vector<128x384xf32>
    %cst = arith.constant dense<0.000000e+00> : vector<8x384xf32>
    %3 = tpu.matmul %0, %2, %cst {dimension_numbers = #tpu.dot_dimension_numbers<[1], [0], [0], [1], [0, 0, 1, 1], [], []>} : vector<8x128xf32>, vector<128x384xf32>, vector<8x384xf32> -> vector<8x384xf32>
    %c0_5 = arith.constant 0 : index
    %c0_6 = arith.constant 0 : index
    %4 = vector.load %arg4[%c0_5, %c0_6] : memref<1x384xf32, #tpu.memory_space<vmem>>, vector<1x384xf32>
    %5 = vector.broadcast %4 : vector<1x384xf32> to vector<8x384xf32>
    %6 = arith.addf %3, %5 : vector<8x384xf32>
    %c0_7 = arith.constant 0 : index
    %c0_8 = arith.constant 0 : index
    %7 = vector.load %arg3[%c0_7, %c0_8] : memref<128x384xf32, #tpu.memory_space<vmem>>, vector<128x384xf32>
    %cst_9 = arith.constant dense<0.000000e+00> : vector<8x384xf32>
    %8 = tpu.matmul %1, %7, %cst_9 {dimension_numbers = #tpu.dot_dimension_numbers<[1], [0], [0], [1], [0, 0, 1, 1], [], []>} : vector<8x128xf32>, vector<128x384xf32>, vector<8x384xf32> -> vector<8x384xf32>
    %c0_10 = arith.constant 0 : index
    %c0_11 = arith.constant 0 : index
    %9 = vector.load %arg5[%c0_10, %c0_11] : memref<1x384xf32, #tpu.memory_space<vmem>>, vector<1x384xf32>
    %10 = vector.broadcast %9 : vector<1x384xf32> to vector<8x384xf32>
    %11 = arith.addf %8, %10 : vector<8x384xf32>
    %12 = vector.extract_strided_slice %6 {offsets = [0, 0], sizes = [8, 128], strides = [1, 1]} : vector<8x384xf32> to vector<8x128xf32>
    %13 = vector.extract_strided_slice %6 {offsets = [0, 128], sizes = [8, 128], strides = [1, 1]} : vector<8x384xf32> to vector<8x128xf32>
    %14 = vector.extract_strided_slice %6 {offsets = [0, 256], sizes = [8, 128], strides = [1, 1]} : vector<8x384xf32> to vector<8x128xf32>
    %15 = vector.extract_strided_slice %11 {offsets = [0, 0], sizes = [8, 128], strides = [1, 1]} : vector<8x384xf32> to vector<8x128xf32>
    %16 = vector.extract_strided_slice %11 {offsets = [0, 128], sizes = [8, 128], strides = [1, 1]} : vector<8x384xf32> to vector<8x128xf32>
    %17 = vector.extract_strided_slice %11 {offsets = [0, 256], sizes = [8, 128], strides = [1, 1]} : vector<8x384xf32> to vector<8x128xf32>
    %18 = arith.addf %12, %15 : vector<8x128xf32>
    %19 = arith.negf %18 : vector<8x128xf32>
    %20 = math.exp %19 : vector<8x128xf32>
    %cst_12 = arith.constant 1.000000e+00 : f32
    %21 = vector.broadcast %cst_12 : f32 to vector<8x128xf32>
    %22 = arith.addf %21, %20 : vector<8x128xf32>
    %23 = arith.divf %21, %22 : vector<8x128xf32>
    %24 = arith.addf %13, %16 : vector<8x128xf32>
    %25 = arith.negf %24 : vector<8x128xf32>
    %26 = math.exp %25 : vector<8x128xf32>
    %cst_13 = arith.constant 1.000000e+00 : f32
    %27 = vector.broadcast %cst_13 : f32 to vector<8x128xf32>
    %28 = arith.addf %27, %26 : vector<8x128xf32>
    %29 = arith.divf %27, %28 : vector<8x128xf32>
    %30 = arith.mulf %23, %17 : vector<8x128xf32>
    %31 = arith.addf %14, %30 : vector<8x128xf32>
    %32 = math.tanh %31 : vector<8x128xf32>
    %cst_14 = arith.constant 1.000000e+00 : f32
    %33 = vector.broadcast %cst_14 : f32 to vector<8x128xf32>
    %34 = arith.subf %33, %29 : vector<8x128xf32>
    %35 = arith.mulf %34, %32 : vector<8x128xf32>
    %36 = arith.mulf %29, %1 : vector<8x128xf32>
    %37 = arith.addf %35, %36 : vector<8x128xf32>
    %c0_15 = arith.constant 0 : index
    %c0_16 = arith.constant 0 : index
    %38 = vector.load %arg6[%c0_15, %c0_16] : memref<128x128xf32, #tpu.memory_space<vmem>>, vector<128x128xf32>
    %cst_17 = arith.constant dense<0.000000e+00> : vector<8x128xf32>
    %39 = tpu.matmul %37, %38, %cst_17 {dimension_numbers = #tpu.dot_dimension_numbers<[1], [0], [0], [1], [0, 0, 1, 1], [], []>} : vector<8x128xf32>, vector<128x128xf32>, vector<8x128xf32> -> vector<8x128xf32>
    %c0_18 = arith.constant 0 : index
    %c0_19 = arith.constant 0 : index
    %40 = vector.load %arg7[%c0_18, %c0_19] : memref<1x128xf32, #tpu.memory_space<vmem>>, vector<1x128xf32>
    %41 = vector.broadcast %40 : vector<1x128xf32> to vector<8x128xf32>
    %42 = arith.addf %39, %41 : vector<8x128xf32>
    %cst_20 = arith.constant dense<0xFF800000> : vector<8xf32>
    %43 = vector.multi_reduction <maximumf>, %42, %cst_20 [1] : vector<8x128xf32> to vector<8xf32>
    %44 = vector.shape_cast %43 : vector<8xf32> to vector<8x1xf32>
    %45 = vector.broadcast %44 : vector<8x1xf32> to vector<8x128xf32>
    %46 = arith.subf %42, %45 : vector<8x128xf32>
    %47 = math.exp %46 : vector<8x128xf32>
    %cst_21 = arith.constant dense<0.000000e+00> : vector<8xf32>
    %48 = vector.multi_reduction <add>, %47, %cst_21 [1] : vector<8x128xf32> to vector<8xf32>
    %49 = vector.shape_cast %48 : vector<8xf32> to vector<8x1xf32>
    %50 = math.log %49 : vector<8x1xf32>
    %51 = arith.addf %44, %50 : vector<8x1xf32>
    %52 = vector.broadcast %51 : vector<8x1xf32> to vector<8x128xf32>
    %53 = arith.subf %42, %52 : vector<8x128xf32>
    %c0_22 = arith.constant 0 : index
    %c0_23 = arith.constant 0 : index
    %54 = vector.load %arg8[%c0_22, %c0_23] : memref<8x128xf32, #tpu.memory_space<vmem>>, vector<8x128xf32>
    tpu.vector_store %arg8[%c0_22, %c0_23], %53 {strides = array<i32>} : memref<8x128xf32, #tpu.memory_space<vmem>>, vector<8x128xf32>,
    %c0_24 = arith.constant 0 : index
    %c0_25 = arith.constant 0 : index
    %55 = vector.load %arg9[%c0_24, %c0_25] : memref<8x128xf32, #tpu.memory_space<vmem>>, vector<8x128xf32>
    tpu.vector_store %arg9[%c0_24, %c0_25], %37 {strides = array<i32>} : memref<8x128xf32, #tpu.memory_space<vmem>>, vector<8x128xf32>,
    return
  }
}

</mosaic_0001>

<llo_original>
// kernel: decoder_step_pallas.1
$region0: #{decoder_step_pallas.1}
  #allocation0 [shape = 'u32[]', space=smem, size = 0x4, offset = 0x4, fixed_abs, tag = 'smem constant byte address 0x4 - core index']
  #allocation1 [shape = 'u32[144,128]{1,0:T(1,128)}', space=vmem, size = 0x12000, scoped, tag = 'internal scratch']
  %s0 = inlined_call_operand.hbm [shape: f32[8,128], index: 0, kind: input, shape index: {}]
  %s1 = inlined_call_operand.hbm [shape: f32[8,128], index: 1, kind: input, shape index: {}]
  %s2 = inlined_call_operand.hbm [shape: f32[128,384], index: 2, kind: input, shape index: {}]
  %s3 = inlined_call_operand.hbm [shape: f32[128,384], index: 3, kind: input, shape index: {}]
  %s4 = inlined_call_operand.vmem [shape: f32[1,384], index: 4, kind: input, shape index: {}]
  %s5 = inlined_call_operand.vmem [shape: f32[1,384], index: 5, kind: input, shape index: {}]
  %s6 = inlined_call_operand.hbm [shape: f32[128,128], index: 6, kind: input, shape index: {}]
  %s7 = inlined_call_operand.vmem [shape: f32[1,128], index: 7, kind: input, shape index: {}]
  %s8 = inlined_call_operand.hbm [shape: f32[8,128], index: 8, kind: output, shape index: {0}]
  %s9 = inlined_call_operand.hbm [shape: f32[8,128], index: 9, kind: output, shape index: {1}]
  %10 = xla_tuple %s8, %s9
  %s11 = sld [smem:[#allocation0]]
  $region70: #{decoder_step_pallas.1} parent=0
    _
  %s13 = ssub.s32 1, %s11
  %s14 = scalar_select 0, %s13, %s11
  $region1: #{decoder_step_pallas.1} parent=0
    #allocation2 [shape = 'u8[4096]{0}', space=vmem, size = 0x1000, scoped, tag = 'input window, operand 0, single buffered']
    #allocation3 [shape = 's32[1]{0}', space=sflag, size = 0x4, scoped, tag = 'scoped memory for decoder_step_pallas.1']
    #allocation4 [shape = 's32[1]{0}', space=sflag, size = 0x4, scoped, tag = 'scoped memory for decoder_step_pallas.1']
    #allocation5 [shape = 'u8[4096]{0}', space=vmem, size = 0x1000, scoped, tag = 'input window, operand 1, single buffered']
    #allocation6 [shape = 's32[1]{0}', space=sflag, size = 0x4, scoped, tag = 'scoped memory for decoder_step_pallas.1']
    #allocation7 [shape = 'u8[196608]{0}', space=vmem, size = 0x30000, scoped, tag = 'input window, operand 2, single buffered']
    #allocation8 [shape = 'u8[196608]{0}', space=vmem, size = 0x30000, scoped, tag = 'input window, operand 3, single buffered']
    #allocation9 [shape = 's32[1]{0}', space=sflag, size = 0x4, scoped, tag = 'scoped memory for decoder_step_pallas.1']
    #allocation10 [shape = 'u8[65536]{0}', space=vmem, size = 0x10000, scoped, tag = 'input window, operand 6, single buffered']
    #allocation11 [shape = 'u8[4096]{0}', space=vmem, size = 0x1000, scoped, tag = 'output window, operand 0, single buffered']
    #allocation12 [shape = 'u8[4096]{0}', space=vmem, size = 0x1000, scoped, tag = 'output window, operand 1, single buffered']
    #allocation13 [shape = 's32[1]{0}', space=sflag, size = 0x4, scoped, tag = 'scoped memory for decoder_step_pallas.1']
    %15 = vsyncpa [#allocation3], 0
    %16 = vsyncpa [#allocation6], 0
    %17 = vsyncpa [#allocation9], 0
    %18 = vsyncpa [#allocation4], 0
    %19 = vsyncpa [#allocation13], 0
    // Predicated region
    $region2: #{decoder_step_pallas.1} parent=1 // pred_check
      _
    $region3: #{decoder_step_pallas.1} parent=1 // pred_check_branch
      %21 = sbr.rel (0) target = $region5
    $region4: #{decoder_step_pallas.1} parent=1 // pred_region
      %s23 = ssub.s32 128, 128
      %24 = vsyncadd [#allocation3], %s23
      %s26 = sshll.u32 [#allocation2], 4
      %s27 = int_to_ptr.vmem [resolvable:$true] %s26
      %29 = dma.hbm_to_vmem [thread:$0]  %s0, 128, %s27, [#allocation3]
    $region5: #{decoder_step_pallas.1} parent=1 // pred_fallthru
      _
    // Predicated region
    $region6: #{decoder_step_pallas.1} parent=1 // pred_check
      _
    $region7: #{decoder_step_pallas.1} parent=1 // pred_check_branch
      %31 = sbr.rel (0) target = $region9
    $region8: #{decoder_step_pallas.1} parent=1 // pred_region
      %s33 = ssub.s32 128, 128
      %34 = vsyncadd [#allocation6], %s33
      %s36 = sshll.u32 [#allocation5], 4
      %s37 = int_to_ptr.vmem [resolvable:$true] %s36
      %39 = dma.hbm_to_vmem [thread:$0]  %s1, 128, %s37, [#allocation6]
    $region9: #{decoder_step_pallas.1} parent=1 // pred_fallthru
      _
    // Predicated region
    $region10: #{decoder_step_pallas.1} parent=1 // pred_check
      _
    $region11: #{decoder_step_pallas.1} parent=1 // pred_check_branch
      %41 = sbr.rel (0) target = $region13
    $region12: #{decoder_step_pallas.1} parent=1 // pred_region
      %s43 = ssub.s32 6144, 6144
      %44 = vsyncadd [#allocation6], %s43
      %s45 = sshll.u32 [#allocation7], 4
      %s46 = int_to_ptr.vmem [resolvable:$true] %s45
      %51 = dma.hbm_to_vmem [thread:$0]  %s2, 6144, %s46, [#allocation6], 384, 384, 24
    $region13: #{decoder_step_pallas.1} parent=1 // pred_fallthru
      _
    // Predicated region
    $region14: #{decoder_step_pallas.1} parent=1 // pred_check
      _
    $region15: #{decoder_step_pallas.1} parent=1 // pred_check_branch
      %53 = sbr.rel (0) target = $region17
    $region16: #{decoder_step_pallas.1} parent=1 // pred_region
      %s55 = ssub.s32 6144, 6144
      %56 = vsyncadd [#allocation9], %s55
      %s57 = sshll.u32 [#allocation8], 4
      %s58 = int_to_ptr.vmem [resolvable:$true] %s57
      %63 = dma.hbm_to_vmem [thread:$0]  %s3, 6144, %s58, [#allocation9], 384, 384, 24
    $region17: #{decoder_step_pallas.1} parent=1 // pred_fallthru
      _
    // Predicated region
    $region18: #{decoder_step_pallas.1} parent=1 // pred_check
      _
    $region19: #{decoder_step_pallas.1} parent=1 // pred_check_branch
      %65 = sbr.rel (0) target = $region21
    $region20: #{decoder_step_pallas.1} parent=1 // pred_region
      _
    $region21: #{decoder_step_pallas.1} parent=1 // pred_fallthru
      _
    // Predicated region
    $region22: #{decoder_step_pallas.1} parent=1 // pred_check
      _
    $region23: #{decoder_step_pallas.1} parent=1 // pred_check_branch
      %67 = sbr.rel (0) target = $region25
    $region24: #{decoder_step_pallas.1} parent=1 // pred_region
      _
    $region25: #{decoder_step_pallas.1} parent=1 // pred_fallthru
      _
    // Predicated region
    $region26: #{decoder_step_pallas.1} parent=1 // pred_check
      _
    $region27: #{decoder_step_pallas.1} parent=1 // pred_check_branch
      %69 = sbr.rel (0) target = $region29
    $region28: #{decoder_step_pallas.1} parent=1 // pred_region
      %s71 = ssub.s32 2048, 2048
      %72 = vsyncadd [#allocation9], %s71
      %s73 = sshll.u32 [#allocation10], 4
      %s74 = int_to_ptr.vmem [resolvable:$true] %s73
      %79 = dma.hbm_to_vmem [thread:$0]  %s6, 2048, %s74, [#allocation9], 128, 128, 8
    $region29: #{decoder_step_pallas.1} parent=1 // pred_fallthru
      _
    // Predicated region
    $region30: #{decoder_step_pallas.1} parent=1 // pred_check
      _
    $region31: #{decoder_step_pallas.1} parent=1 // pred_check_branch
      %81 = sbr.rel (0) target = $region33
    $region32: #{decoder_step_pallas.1} parent=1 // pred_region
      _
    $region33: #{decoder_step_pallas.1} parent=1 // pred_fallthru
      _
    // Predicated region
    $region34: #{decoder_step_pallas.1} parent=1 // pred_check
      _
    $region35: #{decoder_step_pallas.1} parent=1 // pred_check_branch
      %83 = sbr.rel (0) target = $region37
    $region36: #{decoder_step_pallas.1} parent=1 // pred_region
      %84 = dma.done [#allocation3], 128
    $region37: #{decoder_step_pallas.1} parent=1 // pred_fallthru
      _
    // Predicated region
    $region38: #{decoder_step_pallas.1} parent=1 // pred_check
      _
    $region39: #{decoder_step_pallas.1} parent=1 // pred_check_branch
      %86 = sbr.rel (0) target = $region41
    $region40: #{decoder_step_pallas.1} parent=1 // pred_region
      %87 = dma.done [#allocation6], 128
    $region41: #{decoder_step_pallas.1} parent=1 // pred_fallthru
      _
    // Predicated region
    $region42: #{decoder_step_pallas.1} parent=1 // pred_check
      _
    $region43: #{decoder_step_pallas.1} parent=1 // pred_check_branch
      %89 = sbr.rel (0) target = $region45
    $region44: #{decoder_step_pallas.1} parent=1 // pred_region
      %90 = dma.done [#allocation6], 6144
    $region45: #{decoder_step_pallas.1} parent=1 // pred_fallthru
      _
    // Predicated region
    $region46: #{decoder_step_pallas.1} parent=1 // pred_check
      _
    $region47: #{decoder_step_pallas.1} parent=1 // pred_check_branch
      %92 = sbr.rel (0) target = $region49
    $region48: #{decoder_step_pallas.1} parent=1 // pred_region
      %93 = dma.done [#allocation9], 6144
    $region49: #{decoder_step_pallas.1} parent=1 // pred_fallthru
      _
    // Predicated region
    $region50: #{decoder_step_pallas.1} parent=1 // pred_check
      _
    $region51: #{decoder_step_pallas.1} parent=1 // pred_check_branch
      %95 = sbr.rel (0) target = $region53
    $region52: #{decoder_step_pallas.1} parent=1 // pred_region
      %96 = dma.done [#allocation9], 2048
    $region53: #{decoder_step_pallas.1} parent=1 // pred_fallthru
      _
    %v97 = vld [vmem:[#allocation2] sm:$0xff]
    %v98 = vld [vmem:[#allocation5] sm:$0xff]
    %v99 = vld [vmem:[#allocation7] sm:$0xff]
    %v100 = vld [vmem:[#allocation7 + $0x8] sm:$0xff]
    %v101 = vld [vmem:[#allocation7 + $0x10] sm:$0xff]
    %v102 = vld [vmem:[#allocation7 + $0x18] sm:$0xff]
    %v103 = vld [vmem:[#allocation7 + $0x20] sm:$0xff]
    %v104 = vld [vmem:[#allocation7 + $0x28] sm:$0xff]
    %v105 = vld [vmem:[#allocation7 + $0x30] sm:$0xff]
    %v106 = vld [vmem:[#allocation7 + $0x38] sm:$0xff]
    %v107 = vld [vmem:[#allocation7 + $0x40] sm:$0xff]
    %v108 = vld [vmem:[#allocation7 + $0x48] sm:$0xff]
    %v109 = vld [vmem:[#allocation7 + $0x50] sm:$0xff]
    %v110 = vld [vmem:[#allocation7 + $0x58] sm:$0xff]
    %v111 = vld [vmem:[#allocation7 + $0x60] sm:$0xff]
    %v112 = vld [vmem:[#allocation7 + $0x68] sm:$0xff]
    %v113 = vld [vmem:[#allocation7 + $0x70] sm:$0xff]
    %v114 = vld [vmem:[#allocation7 + $0x78] sm:$0xff]
    %v115 = vld [vmem:[#allocation7 + $0x80] sm:$0xff]
    %v116 = vld [vmem:[#allocation7 + $0x88] sm:$0xff]
    %v117 = vld [vmem:[#allocation7 + $0x90] sm:$0xff]
    %v118 = vld [vmem:[#allocation7 + $0x98] sm:$0xff]
    %v119 = vld [vmem:[#allocation7 + $0xa0] sm:$0xff]
    %v120 = vld [vmem:[#allocation7 + $0xa8] sm:$0xff]
    %v121 = vld [vmem:[#allocation7 + $0xb0] sm:$0xff]
    %v122 = vld [vmem:[#allocation7 + $0xb8] sm:$0xff]
    %v123 = vld [vmem:[#allocation7 + $0xc0] sm:$0xff]
    %v124 = vld [vmem:[#allocation7 + $0xc8] sm:$0xff]
    %v125 = vld [vmem:[#allocation7 + $0xd0] sm:$0xff]
    %v126 = vld [vmem:[#allocation7 + $0xd8] sm:$0xff]
    %v127 = vld [vmem:[#allocation7 + $0xe0] sm:$0xff]
    %v128 = vld [vmem:[#allocation7 + $0xe8] sm:$0xff]
    %v129 = vld [vmem:[#allocation7 + $0xf0] sm:$0xff]
    %v130 = vld [vmem:[#allocation7 + $0xf8] sm:$0xff]
    %v131 = vld [vmem:[#allocation7 + $0x100] sm:$0xff]
    %v132 = vld [vmem:[#allocation7 + $0x108] sm:$0xff]
    %v133 = vld [vmem:[#allocation7 + $0x110] sm:$0xff]
    %v134 = vld [vmem:[#allocation7 + $0x118] sm:$0xff]
    %v135 = vld [vmem:[#allocation7 + $0x120] sm:$0xff]
    %v136 = vld [vmem:[#allocation7 + $0x128] sm:$0xff]
    %v137 = vld [vmem:[#allocation7 + $0x130] sm:$0xff]
    %v138 = vld [vmem:[#allocation7 + $0x138] sm:$0xff]
    %v139 = vld [vmem:[#allocation7 + $0x140] sm:$0xff]
    %v140 = vld [vmem:[#allocation7 + $0x148] sm:$0xff]
    %v141 = vld [vmem:[#allocation7 + $0x150] sm:$0xff]
    %v142 = vld [vmem:[#allocation7 + $0x158] sm:$0xff]
    %v143 = vld [vmem:[#allocation7 + $0x160] sm:$0xff]
    %v144 = vld [vmem:[#allocation7 + $0x168] sm:$0xff]
    %v145 = vld [vmem:[#allocation7 + $0x170] sm:$0xff]
    %v146 = vld [vmem:[#allocation7 + $0x178] sm:$0xff]
    %v147 = vld [vmem:[%s4] sm:$0x7]
    %v149 = vlaneseq
    %v150 = vshrl.u32 %v149, 7
    %v151 = vsub.s32 0, %v150
    %v152 = vrot.slane %v147, %v151
    %v153 = vlaneseq
    %v154 = vshrl.u32 %v153, 7
    %v155 = vsub.s32 1, %v154
    %v156 = vrot.slane %v147, %v155
    %v157 = vlaneseq
    %v158 = vshrl.u32 %v157, 7
    %v159 = vsub.s32 2, %v158
    %v160 = vrot.slane %v147, %v159
    %164 = vmatprep.subr.mxu0 %v145
    %165 = vmatpush1.msra.mxu0 %v144
    %166 = vmatprep.subr.mxu0 %v142
    %167 = vmatpush1.msra.mxu0 %v141
    %168 = vmatprep.subr.mxu0 %v139
    %169 = vmatpush1.msra.mxu0 %v138
    %170 = vmatprep.subr.mxu0 %v136
    %171 = vmatpush1.msra.mxu0 %v135
    %172 = vmatprep.subr.mxu0 %v133
    %173 = vmatpush1.msra.mxu0 %v132
    %174 = vmatprep.subr.mxu0 %v130
    %175 = vmatpush1.msra.mxu0 %v129
    %176 = vmatprep.subr.mxu0 %v127
    %177 = vmatpush1.msra.mxu0 %v126
    %178 = vmatprep.subr.mxu0 %v124
    %179 = vmatpush1.msra.mxu0 %v123
    %180 = vmatprep.subr.mxu0 %v121
    %181 = vmatpush1.msra.mxu0 %v120
    %182 = vmatprep.subr.mxu0 %v118
    %183 = vmatpush1.msra.mxu0 %v117
    %184 = vmatprep.subr.mxu0 %v115
    %185 = vmatpush1.msra.mxu0 %v114
    %186 = vmatprep.subr.mxu0 %v112
    %187 = vmatpush1.msra.mxu0 %v111
    %188 = vmatprep.subr.mxu0 %v109
    %189 = vmatpush1.msra.mxu0 %v108
    %190 = vmatprep.subr.mxu0 %v106
    %191 = vmatpush1.msra.mxu0 %v105
    %192 = vmatprep.subr.mxu0 %v103
    %193 = vmatpush1.msra.mxu0 %v102
    %194 = vmatprep.subr.mxu0 %v100
    %195 = vmatpush1.msra.mxu0 %v99
    %196 = vmatprep.subr.mxu0 0.0
    %197 = vmatpush2.msra.mxu0 0.0
    %198 = vmatprep.subr.mxu0 0.0
    %199 = vmatpush2.msra.mxu0 0.0
    %200 = vmatprep.subr.mxu0 0.0
    %201 = vmatpush2.msra.mxu0 0.0
    %202 = vmatprep.subr.mxu0 0.0
    %203 = vmatpush2.msra.mxu0 0.0
    %204 = vmatprep.subr.mxu0 0.0
    %205 = vmatpush2.msra.mxu0 0.0
    %206 = vmatprep.subr.mxu0 0.0
    %207 = vmatpush2.msra.mxu0 0.0
    %208 = vmatprep.subr.mxu0 0.0
    %209 = vmatpush2.msra.mxu0 0.0
    %210 = vmatprep.subr.mxu0 0.0
    %211 = vmatpush2.msra.mxu0 0.0
    %212 = vmatprep.subr.mxu0 0.0
    %213 = vmatpush2.msra.mxu0 0.0
    %214 = vmatprep.subr.mxu0 0.0
    %215 = vmatpush2.msra.mxu0 0.0
    %216 = vmatprep.subr.mxu0 0.0
    %217 = vmatpush2.msra.mxu0 0.0
    %218 = vmatprep.subr.mxu0 0.0
    %219 = vmatpush2.msra.mxu0 0.0
    %220 = vmatprep.subr.mxu0 0.0
    %221 = vmatpush2.msra.mxu0 0.0
    %222 = vmatprep.subr.mxu0 0.0
    %223 = vmatpush2.msra.mxu0 0.0
    %224 = vmatprep.subr.mxu0 0.0
    %225 = vmatpush2.msra.mxu0 0.0
    %226 = vmatprep.subr.mxu0 0.0
    %227 = vmatpush2.msra.mxu0 0.0
    %228 = vmatprep.mubr.f32.mxu0 0.0
    %229 = vmatmul.mubr.f32.gmra.mxu0 %v97
    %v230 = vpop.f32.mrf.mxu0
    %v231 = vadd.f32 %v152, %v230
    %v232 = vpop.f32.mrf.mxu0
    %v233 = vadd.f32 %v156, %v232
    %234 = vdwg.mxu0
    %235 = vmatprep.subr.mxu0 0.0
    %236 = vmatpush1.msra.mxu0 %v146
    %237 = vmatprep.subr.mxu0 0.0
    %238 = vmatpush1.msra.mxu0 %v143
    %239 = vmatprep.subr.mxu0 0.0
    %240 = vmatpush1.msra.mxu0 %v140
    %241 = vmatprep.subr.mxu0 0.0
    %242 = vmatpush1.msra.mxu0 %v137
    %243 = vmatprep.subr.mxu0 0.0
    %244 = vmatpush1.msra.mxu0 %v134
    %245 = vmatprep.subr.mxu0 0.0
    %246 = vmatpush1.msra.mxu0 %v131
    %247 = vmatprep.subr.mxu0 0.0
    %248 = vmatpush1.msra.mxu0 %v128
    %249 = vmatprep.subr.mxu0 0.0
    %250 = vmatpush1.msra.mxu0 %v125
    %251 = vmatprep.subr.mxu0 0.0
    %252 = vmatpush1.msra.mxu0 %v122
    %253 = vmatprep.subr.mxu0 0.0
    %254 = vmatpush1.msra.mxu0 %v119
    %255 = vmatprep.subr.mxu0 0.0
    %256 = vmatpush1.msra.mxu0 %v116
    %257 = vmatprep.subr.mxu0 0.0
    %258 = vmatpush1.msra.mxu0 %v113
    %259 = vmatprep.subr.mxu0 0.0
    %260 = vmatpush1.msra.mxu0 %v110
    %261 = vmatprep.subr.mxu0 0.0
    %262 = vmatpush1.msra.mxu0 %v107
    %263 = vmatprep.subr.mxu0 0.0
    %264 = vmatpush1.msra.mxu0 %v104
    %265 = vmatprep.subr.mxu0 0.0
    %266 = vmatpush1.msra.mxu0 %v101
    %267 = vmatprep.subr.mxu0 0.0
    %268 = vmatpush2.msra.mxu0 0.0
    %269 = vmatprep.subr.mxu0 0.0
    %270 = vmatpush2.msra.mxu0 0.0
    %271 = vmatprep.subr.mxu0 0.0
    %272 = vmatpush2.msra.mxu0 0.0
    %273 = vmatprep.subr.mxu0 0.0
    %274 = vmatpush2.msra.mxu0 0.0
    %275 = vmatprep.subr.mxu0 0.0
    %276 = vmatpush2.msra.mxu0 0.0
    %277 = vmatprep.subr.mxu0 0.0
    %278 = vmatpush2.msra.mxu0 0.0
    %279 = vmatprep.subr.mxu0 0.0
    %280 = vmatpush2.msra.mxu0 0.0
    %281 = vmatprep.subr.mxu0 0.0
    %282 = vmatpush2.msra.mxu0 0.0
    %283 = vmatprep.subr.mxu0 0.0
    %284 = vmatpush2.msra.mxu0 0.0
    %285 = vmatprep.subr.mxu0 0.0
    %286 = vmatpush2.msra.mxu0 0.0
    %287 = vmatprep.subr.mxu0 0.0
    %288 = vmatpush2.msra.mxu0 0.0
    %289 = vmatprep.subr.mxu0 0.0
    %290 = vmatpush2.msra.mxu0 0.0
    %291 = vmatprep.subr.mxu0 0.0
    %292 = vmatpush2.msra.mxu0 0.0
    %293 = vmatprep.subr.mxu0 0.0
    %294 = vmatpush2.msra.mxu0 0.0
    %295 = vmatprep.subr.mxu0 0.0
    %296 = vmatpush2.msra.mxu0 0.0
    %297 = vmatprep.subr.mxu0 0.0
    %298 = vmatpush2.msra.mxu0 0.0
    %299 = vmatprep.mubr.f32.mxu0 0.0
    %300 = vmatmul.mubr.f32.gmra.mxu0 %v97
    %v301 = vpop.f32.mrf.mxu0
    %v302 = vadd.f32 %v160, %v301
    %v303 = vpop.f32.mrf.mxu0
    %304 = vdwg.mxu0
    %v305 = vld [vmem:[#allocation8] sm:$0xff]
    %v306 = vld [vmem:[#allocation8 + $0x8] sm:$0xff]
    %v307 = vld [vmem:[#allocation8 + $0x10] sm:$0xff]
    %v308 = vld [vmem:[#allocation8 + $0x18] sm:$0xff]
    %v309 = vld [vmem:[#allocation8 + $0x20] sm:$0xff]
    %v310 = vld [vmem:[#allocation8 + $0x28] sm:$0xff]
    %v311 = vld [vmem:[#allocation8 + $0x30] sm:$0xff]
    %v312 = vld [vmem:[#allocation8 + $0x38] sm:$0xff]
    %v313 = vld [vmem:[#allocation8 + $0x40] sm:$0xff]
    %v314 = vld [vmem:[#allocation8 + $0x48] sm:$0xff]
    %v315 = vld [vmem:[#allocation8 + $0x50] sm:$0xff]
    %v316 = vld [vmem:[#allocation8 + $0x58] sm:$0xff]
    %v317 = vld [vmem:[#allocation8 + $0x60] sm:$0xff]
    %v318 = vld [vmem:[#allocation8 + $0x68] sm:$0xff]
    %v319 = vld [vmem:[#allocation8 + $0x70] sm:$0xff]
    %v320 = vld [vmem:[#allocation8 + $0x78] sm:$0xff]
    %v321 = vld [vmem:[#allocation8 + $0x80] sm:$0xff]
    %v322 = vld [vmem:[#allocation8 + $0x88] sm:$0xff]
    %v323 = vld [vmem:[#allocation8 + $0x90] sm:$0xff]
    %v324 = vld [vmem:[#allocation8 + $0x98] sm:$0xff]
    %v325 = vld [vmem:[#allocation8 + $0xa0] sm:$0xff]
    %v326 = vld [vmem:[#allocation8 + $0xa8] sm:$0xff]
    %v327 = vld [vmem:[#allocation8 + $0xb0] sm:$0xff]
    %v328 = vld [vmem:[#allocation8 + $0xb8] sm:$0xff]
    %v329 = vld [vmem:[#allocation8 + $0xc0] sm:$0xff]
    %v330 = vld [vmem:[#allocation8 + $0xc8] sm:$0xff]
    %v331 = vld [vmem:[#allocation8 + $0xd0] sm:$0xff]
    %v332 = vld [vmem:[#allocation8 + $0xd8] sm:$0xff]
    %v333 = vld [vmem:[#allocation8 + $0xe0] sm:$0xff]
    %v334 = vld [vmem:[#allocation8 + $0xe8] sm:$0xff]
    %v335 = vld [vmem:[#allocation8 + $0xf0] sm:$0xff]
    %v336 = vld [vmem:[#allocation8 + $0xf8] sm:$0xff]
    %v337 = vld [vmem:[#allocation8 + $0x100] sm:$0xff]
    %v338 = vld [vmem:[#allocation8 + $0x108] sm:$0xff]
    %v339 = vld [vmem:[#allocation8 + $0x110] sm:$0xff]
    %v340 = vld [vmem:[#allocation8 + $0x118] sm:$0xff]
    %v341 = vld [vmem:[#allocation8 + $0x120] sm:$0xff]
    %v342 = vld [vmem:[#allocation8 + $0x128] sm:$0xff]
    %v343 = vld [vmem:[#allocation8 + $0x130] sm:$0xff]
    %v344 = vld [vmem:[#allocation8 + $0x138] sm:$0xff]
    %v345 = vld [vmem:[#allocation8 + $0x140] sm:$0xff]
    %v346 = vld [vmem:[#allocation8 + $0x148] sm:$0xff]
    %v347 = vld [vmem:[#allocation8 + $0x150] sm:$0xff]
    %v348 = vld [vmem:[#allocation8 + $0x158] sm:$0xff]
    %v349 = vld [vmem:[#allocation8 + $0x160] sm:$0xff]
    %v350 = vld [vmem:[#allocation8 + $0x168] sm:$0xff]
    %v351 = vld [vmem:[#allocation8 + $0x170] sm:$0xff]
    %v352 = vld [vmem:[#allocation8 + $0x178] sm:$0xff]
    %v353 = vld [vmem:[%s5] sm:$0x7]
    %v355 = vlaneseq
    %v356 = vshrl.u32 %v355, 7
    %v357 = vsub.s32 0, %v356
    %v358 = vrot.slane %v353, %v357
    %v359 = vlaneseq
    %v360 = vshrl.u32 %v359, 7
    %v361 = vsub.s32 1, %v360
    %v362 = vrot.slane %v353, %v361
    %v363 = vlaneseq
    %v364 = vshrl.u32 %v363, 7
    %v365 = vsub.s32 2, %v364
    %v366 = vrot.slane %v353, %v365
    %370 = vmatprep.subr.mxu0 %v351
    %371 = vmatpush1.msra.mxu0 %v350
    %372 = vmatprep.subr.mxu0 %v348
    %373 = vmatpush1.msra.mxu0 %v347
    %374 = vmatprep.subr.mxu0 %v345
    %375 = vmatpush1.msra.mxu0 %v344
    %376 = vmatprep.subr.mxu0 %v342
    %377 = vmatpush1.msra.mxu0 %v341
    %378 = vmatprep.subr.mxu0 %v339
    %379 = vmatpush1.msra.mxu0 %v338
    %380 = vmatprep.subr.mxu0 %v336
    %381 = vmatpush1.msra.mxu0 %v335
    %382 = vmatprep.subr.mxu0 %v333
    %383 = vmatpush1.msra.mxu0 %v332
    %384 = vmatprep.subr.mxu0 %v330
    %385 = vmatpush1.msra.mxu0 %v329
    %386 = vmatprep.subr.mxu0 %v327
    %387 = vmatpush1.msra.mxu0 %v326
    %388 = vmatprep.subr.mxu0 %v324
    %389 = vmatpush1.msra.mxu0 %v323
    %390 = vmatprep.subr.mxu0 %v321
    %391 = vmatpush1.msra.mxu0 %v320
    %392 = vmatprep.subr.mxu0 %v318
    %393 = vmatpush1.msra.mxu0 %v317
    %394 = vmatprep.subr.mxu0 %v315
    %395 = vmatpush1.msra.mxu0 %v314
    %396 = vmatprep.subr.mxu0 %v312
    %397 = vmatpush1.msra.mxu0 %v311
    %398 = vmatprep.subr.mxu0 %v309
    %399 = vmatpush1.msra.mxu0 %v308
    %400 = vmatprep.subr.mxu0 %v306
    %401 = vmatpush1.msra.mxu0 %v305
    %402 = vmatprep.subr.mxu0 0.0
    %403 = vmatpush2.msra.mxu0 0.0
    %404 = vmatprep.subr.mxu0 0.0
    %405 = vmatpush2.msra.mxu0 0.0
    %406 = vmatprep.subr.mxu0 0.0
    %407 = vmatpush2.msra.mxu0 0.0
    %408 = vmatprep.subr.mxu0 0.0
    %409 = vmatpush2.msra.mxu0 0.0
    %410 = vmatprep.subr.mxu0 0.0
    %411 = vmatpush2.msra.mxu0 0.0
    %412 = vmatprep.subr.mxu0 0.0
    %413 = vmatpush2.msra.mxu0 0.0
    %414 = vmatprep.subr.mxu0 0.0
    %415 = vmatpush2.msra.mxu0 0.0
    %416 = vmatprep.subr.mxu0 0.0
    %417 = vmatpush2.msra.mxu0 0.0
    %418 = vmatprep.subr.mxu0 0.0
    %419 = vmatpush2.msra.mxu0 0.0
    %420 = vmatprep.subr.mxu0 0.0
    %421 = vmatpush2.msra.mxu0 0.0
    %422 = vmatprep.subr.mxu0 0.0
    %423 = vmatpush2.msra.mxu0 0.0
    %424 = vmatprep.subr.mxu0 0.0
    %425 = vmatpush2.msra.mxu0 0.0
    %426 = vmatprep.subr.mxu0 0.0
    %427 = vmatpush2.msra.mxu0 0.0
    %428 = vmatprep.subr.mxu0 0.0
    %429 = vmatpush2.msra.mxu0 0.0
    %430 = vmatprep.subr.mxu0 0.0
    %431 = vmatpush2.msra.mxu0 0.0
    %432 = vmatprep.subr.mxu0 0.0
    %433 = vmatpush2.msra.mxu0 0.0
    %434 = vmatprep.mubr.f32.mxu0 0.0
    %435 = vmatmul.mubr.f32.gmra.mxu0 %v98
    %v436 = vpop.f32.mrf.mxu0
    %v437 = vadd.f32 %v358, %v436
    %v438 = vpop.f32.mrf.mxu0
    %v439 = vadd.f32 %v362, %v438
    %440 = vdwg.mxu0
    %441 = vmatprep.subr.mxu0 0.0
    %442 = vmatpush1.msra.mxu0 %v352
    %443 = vmatprep.subr.mxu0 0.0
    %444 = vmatpush1.msra.mxu0 %v349
    %445 = vmatprep.subr.mxu0 0.0
    %446 = vmatpush1.msra.mxu0 %v346
    %447 = vmatprep.subr.mxu0 0.0
    %448 = vmatpush1.msra.mxu0 %v343
    %449 = vmatprep.subr.mxu0 0.0
    %450 = vmatpush1.msra.mxu0 %v340
    %451 = vmatprep.subr.mxu0 0.0
    %452 = vmatpush1.msra.mxu0 %v337
    %453 = vmatprep.subr.mxu0 0.0
    %454 = vmatpush1.msra.mxu0 %v334
    %455 = vmatprep.subr.mxu0 0.0
    %456 = vmatpush1.msra.mxu0 %v331
    %457 = vmatprep.subr.mxu0 0.0
    %458 = vmatpush1.msra.mxu0 %v328
    %459 = vmatprep.subr.mxu0 0.0
    %460 = vmatpush1.msra.mxu0 %v325
    %461 = vmatprep.subr.mxu0 0.0
    %462 = vmatpush1.msra.mxu0 %v322
    %463 = vmatprep.subr.mxu0 0.0
    %464 = vmatpush1.msra.mxu0 %v319
    %465 = vmatprep.subr.mxu0 0.0
    %466 = vmatpush1.msra.mxu0 %v316
    %467 = vmatprep.subr.mxu0 0.0
    %468 = vmatpush1.msra.mxu0 %v313
    %469 = vmatprep.subr.mxu0 0.0
    %470 = vmatpush1.msra.mxu0 %v310
    %471 = vmatprep.subr.mxu0 0.0
    %472 = vmatpush1.msra.mxu0 %v307
    %473 = vmatprep.subr.mxu0 0.0
    %474 = vmatpush2.msra.mxu0 0.0
    %475 = vmatprep.subr.mxu0 0.0
    %476 = vmatpush2.msra.mxu0 0.0
    %477 = vmatprep.subr.mxu0 0.0
    %478 = vmatpush2.msra.mxu0 0.0
    %479 = vmatprep.subr.mxu0 0.0
    %480 = vmatpush2.msra.mxu0 0.0
    %481 = vmatprep.subr.mxu0 0.0
    %482 = vmatpush2.msra.mxu0 0.0
    %483 = vmatprep.subr.mxu0 0.0
    %484 = vmatpush2.msra.mxu0 0.0
    %485 = vmatprep.subr.mxu0 0.0
    %486 = vmatpush2.msra.mxu0 0.0
    %487 = vmatprep.subr.mxu0 0.0
    %488 = vmatpush2.msra.mxu0 0.0
    %489 = vmatprep.subr.mxu0 0.0
    %490 = vmatpush2.msra.mxu0 0.0
    %491 = vmatprep.subr.mxu0 0.0
    %492 = vmatpush2.msra.mxu0 0.0
    %493 = vmatprep.subr.mxu0 0.0
    %494 = vmatpush2.msra.mxu0 0.0
    %495 = vmatprep.subr.mxu0 0.0
    %496 = vmatpush2.msra.mxu0 0.0
    %497 = vmatprep.subr.mxu0 0.0
    %498 = vmatpush2.msra.mxu0 0.0
    %499 = vmatprep.subr.mxu0 0.0
    %500 = vmatpush2.msra.mxu0 0.0
    %501 = vmatprep.subr.mxu0 0.0
    %502 = vmatpush2.msra.mxu0 0.0
    %503 = vmatprep.subr.mxu0 0.0
    %504 = vmatpush2.msra.mxu0 0.0
    %505 = vmatprep.mubr.f32.mxu0 0.0
    %506 = vmatmul.mubr.f32.gmra.mxu0 %v98
    %v507 = vpop.f32.mrf.mxu0
    %v508 = vadd.f32 %v366, %v507
    %v509 = vpop.f32.mrf.mxu0
    %510 = vdwg.mxu0
    %v511 = vadd.f32 %v231, %v437
    %v512 = vxor.u32 %v511, 2147483648
    %v513 = vmul.f32 %v512, 1.442695
    %v514 = vpow.pop %v513
    %v515 = vadd.f32 %v514, 1.0
    %v516 = vrcp.pop %v515
    %v517 = vmul.f32 1.0, %v516
    %v518 = vadd.f32 %v233, %v439
    %v519 = vxor.u32 %v518, 2147483648
    %v520 = vmul.f32 %v519, 1.442695
    %v521 = vpow.pop %v520
    %v522 = vadd.f32 %v521, 1.0
    %v523 = vrcp.pop %v522
    %v524 = vmul.f32 1.0, %v523
    %v525 = vmul.f32 %v517, %v508
    %v526 = vadd.f32 %v302, %v525
    %v527 = vtanh.pop %v526
    %v528 = vsub.f32 1.0, %v524
    %v529 = vmul.f32 %v528, %v527
    %v530 = vmul.f32 %v524, %v98
    %v531 = vadd.f32 %v529, %v530
    %v532 = vld [vmem:[#allocation10] sm:$0xff]
    %v533 = vld [vmem:[#allocation10 + $0x8] sm:$0xff]
    %v534 = vld [vmem:[#allocation10 + $0x10] sm:$0xff]
    %v535 = vld [vmem:[#allocation10 + $0x18] sm:$0xff]
    %v536 = vld [vmem:[#allocation10 + $0x20] sm:$0xff]
    %v537 = vld [vmem:[#allocation10 + $0x28] sm:$0xff]
    %v538 = vld [vmem:[#allocation10 + $0x30] sm:$0xff]
    %v539 = vld [vmem:[#allocation10 + $0x38] sm:$0xff]
    %v540 = vld [vmem:[#allocation10 + $0x40] sm:$0xff]
    %v541 = vld [vmem:[#allocation10 + $0x48] sm:$0xff]
    %v542 = vld [vmem:[#allocation10 + $0x50] sm:$0xff]
    %v543 = vld [vmem:[#allocation10 + $0x58] sm:$0xff]
    %v544 = vld [vmem:[#allocation10 + $0x60] sm:$0xff]
    %v545 = vld [vmem:[#allocation10 + $0x68] sm:$0xff]
    %v546 = vld [vmem:[#allocation10 + $0x70] sm:$0xff]
    %v547 = vld [vmem:[#allocation10 + $0x78] sm:$0xff]
    %v548 = vld [vmem:[%s7] sm:$0x1]
    %v550 = vlaneseq
    %v551 = vshrl.u32 %v550, 7
    %v552 = vsub.s32 0, %v551
    %v553 = vrot.slane %v548, %v552
    %555 = vmatprep.subr.mxu0 0.0
    %556 = vmatpush1.msra.mxu0 %v547
    %557 = vmatprep.subr.mxu0 0.0
    %558 = vmatpush1.msra.mxu0 %v546
    %559 = vmatprep.subr.mxu0 0.0
    %560 = vmatpush1.msra.mxu0 %v545
    %561 = vmatprep.subr.mxu0 0.0
    %562 = vmatpush1.msra.mxu0 %v544
    %563 = vmatprep.subr.mxu0 0.0
    %564 = vmatpush1.msra.mxu0 %v543
    %565 = vmatprep.subr.mxu0 0.0
    %566 = vmatpush1.msra.mxu0 %v542
    %567 = vmatprep.subr.mxu0 0.0
    %568 = vmatpush1.msra.mxu0 %v541
    %569 = vmatprep.subr.mxu0 0.0
    %570 = vmatpush1.msra.mxu0 %v540
    %571 = vmatprep.subr.mxu0 0.0
    %572 = vmatpush1.msra.mxu0 %v539
    %573 = vmatprep.subr.mxu0 0.0
    %574 = vmatpush1.msra.mxu0 %v538
    %575 = vmatprep.subr.mxu0 0.0
    %576 = vmatpush1.msra.mxu0 %v537
    %577 = vmatprep.subr.mxu0 0.0
    %578 = vmatpush1.msra.mxu0 %v536
    %579 = vmatprep.subr.mxu0 0.0
    %580 = vmatpush1.msra.mxu0 %v535
    %581 = vmatprep.subr.mxu0 0.0
    %582 = vmatpush1.msra.mxu0 %v534
    %583 = vmatprep.subr.mxu0 0.0
    %584 = vmatpush1.msra.mxu0 %v533
    %585 = vmatprep.subr.mxu0 0.0
    %586 = vmatpush1.msra.mxu0 %v532
    %587 = vmatprep.subr.mxu0 0.0
    %588 = vmatpush2.msra.mxu0 0.0
    %589 = vmatprep.subr.mxu0 0.0
    %590 = vmatpush2.msra.mxu0 0.0
    %591 = vmatprep.subr.mxu0 0.0
    %592 = vmatpush2.msra.mxu0 0.0
    %593 = vmatprep.subr.mxu0 0.0
    %594 = vmatpush2.msra.mxu0 0.0
    %595 = vmatprep.subr.mxu0 0.0
    %596 = vmatpush2.msra.mxu0 0.0
    %597 = vmatprep.subr.mxu0 0.0
    %598 = vmatpush2.msra.mxu0 0.0
    %599 = vmatprep.subr.mxu0 0.0
    %600 = vmatpush2.msra.mxu0 0.0
    %601 = vmatprep.subr.mxu0 0.0
    %602 = vmatpush2.msra.mxu0 0.0
    %603 = vmatprep.subr.mxu0 0.0
    %604 = vmatpush2.msra.mxu0 0.0
    %605 = vmatprep.subr.mxu0 0.0
    %606 = vmatpush2.msra.mxu0 0.0
    %607 = vmatprep.subr.mxu0 0.0
    %608 = vmatpush2.msra.mxu0 0.0
    %609 = vmatprep.subr.mxu0 0.0
    %610 = vmatpush2.msra.mxu0 0.0
    %611 = vmatprep.subr.mxu0 0.0
    %612 = vmatpush2.msra.mxu0 0.0
    %613 = vmatprep.subr.mxu0 0.0
    %614 = vmatpush2.msra.mxu0 0.0
    %615 = vmatprep.subr.mxu0 0.0
    %616 = vmatpush2.msra.mxu0 0.0
    %617 = vmatprep.subr.mxu0 0.0
    %618 = vmatpush2.msra.mxu0 0.0
    %619 = vmatprep.mubr.f32.mxu0 0.0
    %620 = vmatmul.mubr.f32.gmra.mxu0 %v531
    %v621 = vpop.f32.mrf.mxu0
    %v622 = vadd.f32 %v553, %v621
    %v623 = vpop.f32.mrf.mxu0
    %624 = vdwg.mxu0
    %625 = vmax.xlane.f32.xlu0 %v622
    %v626 = vpop.xlane.xlu0 %625
    %v627 = vsub.f32 %v622, %v626
    %v628 = vmul.f32 %v627, 1.442695
    %v629 = vpow.pop %v628
    %630 = vadd.xlane.f32.xlu0 %v629
    %v631 = vpop.xlane.xlu0 %630
    %v632 = vlog2.pop %v631
    %v633 = vmul.f32 %v632, 0.6931472
    %v634 = vadd.f32 %v626, %v633
    %v635 = vsub.f32 %v622, %v634
    %636 = vst [vmem:[#allocation11] sm:$0xff] %v635
    %637 = vst [vmem:[#allocation12] sm:$0xff] %v531
    // Predicated region
    $region54: #{decoder_step_pallas.1} parent=1 // pred_check
      _
    $region55: #{decoder_step_pallas.1} parent=1 // pred_check_branch
      %639 = sbr.rel (0) target = $region57
    $region56: #{decoder_step_pallas.1} parent=1 // pred_region
      %s641 = ssub.s32 128, 128
      %642 = vsyncadd [#allocation4], %s641
      %s644 = sshll.u32 [#allocation11], 4
      %s645 = int_to_ptr.vmem [resolvable:$true] %s644
      %647 = dma.vmem_to_hbm [thread:$0]  %s645, 128, %s8, [#allocation4]
    $region57: #{decoder_step_pallas.1} parent=1 // pred_fallthru
      _
    // Predicated region
    $region58: #{decoder_step_pallas.1} parent=1 // pred_check
      _
    $region59: #{decoder_step_pallas.1} parent=1 // pred_check_branch
      %649 = sbr.rel (0) target = $region61
    $region60: #{decoder_step_pallas.1} parent=1 // pred_region
      %s651 = ssub.s32 128, 128
      %652 = vsyncadd [#allocation13], %s651
      %s654 = sshll.u32 [#allocation12], 4
      %s655 = int_to_ptr.vmem [resolvable:$true] %s654
      %657 = dma.vmem_to_hbm [thread:$0]  %s655, 128, %s9, [#allocation13]
    $region61: #{decoder_step_pallas.1} parent=1 // pred_fallthru
      _
    // Predicated region
    $region62: #{decoder_step_pallas.1} parent=1 // pred_check
      _
    $region63: #{decoder_step_pallas.1} parent=1 // pred_check_branch
      %659 = sbr.rel (0) target = $region65
    $region64: #{decoder_step_pallas.1} parent=1 // pred_region
      %660 = dma.done [#allocation4], 128
    $region65: #{decoder_step_pallas.1} parent=1 // pred_fallthru
      _
    // Predicated region
    $region66: #{decoder_step_pallas.1} parent=1 // pred_check
      _
    $region67: #{decoder_step_pallas.1} parent=1 // pred_check_branch
      %662 = sbr.rel (0) target = $region69
    $region68: #{decoder_step_pallas.1} parent=1 // pred_region
      %663 = dma.done [#allocation13], 128
    $region69: #{decoder_step_pallas.1} parent=1 // pred_fallthru
      _
    %664 = vsyncpa [#allocation3], 1
    %665 = vsyncpa [#allocation6], 1
    %666 = vsyncpa [#allocation9], 1
    %667 = vsyncpa [#allocation4], 1
    %668 = vsyncpa [#allocation13], 1

</llo_original>
